<compile_context>
chip_gen: v6e
topology: v6e:2x2x1
jax: 0.10.0
libtpu: 0.0.40
codegen_flags: <defaults>
</compile_context>

<pallas_src>
import functools

import jax
import jax.numpy as jnp
from jax.experimental import pallas as pl
from jax.experimental.pallas import tpu as pltpu


def _round_up(a: int, b: int) -> int:
    return (a + b - 1) // b * b


def _round_down(a: int, b: int) -> int:
    return (a // b) * b


def _sublane(dtype) -> int:
    # sublane packing granularity: 8 rows for 32-bit, 16 for bf16, 32 for 8-bit
    return max(8, 32 // jnp.dtype(dtype).itemsize)


def _sc_kernel(x_ref, y_ref, dpart_ref, ypart_ref, *,
               tile_rows, chan, n_valid, num_tiles, chunk_tiles,
               last_partial, has_overrun):
    """Accumulate partial sums of (y - x)^2 and y^2 into (1, chan) output refs.

    x_ref / y_ref:        (tile_rows, chan) block of one batch element.
    dpart_ref / ypart_ref: (1, chan) grid-resident per-(batch, chunk) partials.
    """
    p = pl.program_id(1)             # "parallel" chunk index (v7x second core)
    t = pl.program_id(2)             # reduction (frame-tile) index
    g = p * chunk_tiles + t          # un-clamped global tile index

    @pl.when(t == 0)
    def _init():
        dpart_ref[...] = jnp.zeros(dpart_ref.shape, dpart_ref.dtype)
        ypart_ref[...] = jnp.zeros(ypart_ref.shape, ypart_ref.dtype)

    x = x_ref[...].astype(jnp.float32)
    y = y_ref[...].astype(jnp.float32)
    d = y - x
    d2 = d * d
    y2 = y * y

    def _accum(d2v, y2v):
        # Sublane reduce goes to the XLU slot and is hidden under DMA.
        dpart_ref[...] += jnp.sum(d2v, axis=0, keepdims=True)
        ypart_ref[...] += jnp.sum(y2v, axis=0, keepdims=True)

    if last_partial or has_overrun:
        conds = []
        if last_partial:
            conds.append(g == num_tiles - 1)   # partial last valid tile
        if has_overrun:
            conds.append(g >= num_tiles)       # duplicate/overrun chunk tile
        needs_mask = conds[0]
        for c in conds[1:]:
            needs_mask = jnp.logical_or(needs_mask, c)

        @pl.when(jnp.logical_not(needs_mask))
        def _full():
            _accum(d2, y2)

        @pl.when(needs_mask)
        def _masked():
            # Element-level validity: flat index within the batch plane
            # (frame * F + freq, or row * 128 + lane) must be < min_len * F.
            # jnp.where is a select, so garbage / NaN / Inf in padded regions
            # is harmless.
            rows = jax.lax.broadcasted_iota(jnp.int32, (tile_rows, chan), 0)
            lanes = jax.lax.broadcasted_iota(jnp.int32, (tile_rows, chan), 1)
            flat = (g * tile_rows + rows) * chan + lanes
            valid = flat < n_valid
            _accum(jnp.where(valid, d2, 0.0), jnp.where(valid, y2, 0.0))
    else:
        _accum(d2, y2)


def spectral_convergence_loss(x_mag: jax.Array, y_mag: jax.Array, *,
                              input_vmem_budget: int = 16 * 1024 * 1024
                              ) -> jax.Array:
    """Pallas equivalent of SpectralConvergengeLoss.forward."""
    assert x_mag.ndim == 3 and y_mag.ndim == 3, "expected (B, #frames, #freq_bins)"
    B, Lx, F = x_mag.shape
    By, Ly, Fy = y_mag.shape
    assert B == By and F == Fy, "batch / freq_bins must match"
    min_len = min(Lx, Ly)
    if min_len == 0 or F == 0:
        # torch.norm(empty)/torch.norm(empty) == 0/0 == nan
        return jnp.array(jnp.nan, dtype=jnp.float32)

    n_valid = min_len * F  # valid elements per batch plane
    sub = max(_sublane(x_mag.dtype), _sublane(y_mag.dtype))

    # Lane-dense view: if F is lane-sparse (F % 128 != 0) but each batch plane
    # reshapes freely (metadata-only) to (rows, 128), stream (rows, 128) blocks.
    flat_ok = (F % 128 != 0) and (Lx * F) % 128 == 0 and (Ly * F) % 128 == 0
    if flat_ok:
        chan, rx, ry = 128, (Lx * F) // 128, (Ly * F) // 128
    else:
        chan, rx, ry = F, Lx, Ly
    rows_needed = pl.cdiv(n_valid, chan)
    row_cap = min(_round_down(rx, sub), _round_down(ry, sub),
                  _round_up(rows_needed, sub))

    if row_cap >= sub:
        x_arr = x_mag.reshape(B, rx, chan) if flat_ok else x_mag
        y_arr = y_mag.reshape(B, ry, chan) if flat_ok else y_mag
        # Dtype-aware block sizing: both inputs, double-buffered, within budget
        # (VMEM rows are lane-padded to a multiple of 128).
        chan_pad = _round_up(chan, 128)
        row_bytes = chan_pad * (x_mag.dtype.itemsize + y_mag.dtype.itemsize)
        target_rows = max(sub, _round_down(input_vmem_budget // (2 * row_bytes), sub))
        tile_rows = min(row_cap, target_rows)
        num_tiles = pl.cdiv(rows_needed, tile_rows)
        # v7x: guarantee >= 2 units of "parallel" work when B == 1 so the second
        # TensorCore is not idle; each chunk writes its own (1, chan) partial.
        P = 2 if (B == 1 and num_tiles >= 2) else 1
        chunk_tiles = pl.cdiv(num_tiles, P)
        last_partial = num_tiles * tile_rows * chan > n_valid
        has_overrun = P * chunk_tiles > num_tiles
    else:
        # Tiny frame axis: a slice copy is negligible; single full-extent tile.
        chan, tile_rows = F, min_len
        x_arr = x_mag[:, :min_len]
        y_arr = y_mag[:, :min_len]
        num_tiles, P, chunk_tiles = 1, 1, 1
        last_partial = has_overrun = False

    def in_index(b, p, t):
        g = p * chunk_tiles + t
        if has_overrun:
            # Overrun tiles re-read the last valid block; their contribution is
            # fully masked in the kernel (mask uses the un-clamped index).
            g = jnp.minimum(g, num_tiles - 1)
        return (b, g, 0)

    kernel = functools.partial(
        _sc_kernel, tile_rows=tile_rows, chan=chan, n_valid=n_valid,
        num_tiles=num_tiles, chunk_tiles=chunk_tiles,
        last_partial=last_partial, has_overrun=has_overrun)

    dpart, ypart = pl.pallas_call(
        kernel,
        out_shape=(jax.ShapeDtypeStruct((B, P, 1, chan), jnp.float32),
                   jax.ShapeDtypeStruct((B, P, 1, chan), jnp.float32)),
        grid_spec=pltpu.PrefetchScalarGridSpec(
            num_scalar_prefetch=0,
            grid=(B, P, chunk_tiles),
            in_specs=[
                pl.BlockSpec((None, tile_rows, chan), in_index),
                pl.BlockSpec((None, tile_rows, chan), in_index),
            ],
            out_specs=[
                pl.BlockSpec((None, None, 1, chan), lambda b, p, t: (b, p, 0, 0)),
                pl.BlockSpec((None, None, 1, chan), lambda b, p, t: (b, p, 0, 0)),
            ],
        ),
        compiler_params=pltpu.CompilerParams(
            # batch / chunk axes independent -> parallel (both v7x TensorCores);
            # frame-tile axis is the reduction -> arbitrary.
            dimension_semantics=("parallel", "parallel", "arbitrary"),
            # ~16 MiB of double-buffered inputs + small outputs; 32 MiB fits all
            # generations (v5e default would be 16 MiB) with headroom on v7x.
            vmem_limit_bytes=32 * 1024 * 1024,
        ),
    )(x_arr, y_arr)

    # Tiny epilogue in plain JAX: Frobenius-norm ratio (all-zero y -> inf/nan,
    # matching torch.norm(diff) / torch.norm(y)).
    diff_ss = jnp.sum(dpart)
    y_ss = jnp.sum(ypart)
    return jnp.sqrt(diff_ss) / jnp.sqrt(y_ss)


if __name__ == "__main__":
    key = jax.random.PRNGKey(0)
    ks = jax.random.split(key, 8)

    def ref_loss(x, y):
        m = min(x.shape[1], y.shape[1])
        xm = x[:, :m].astype(jnp.float32)
        ym = y[:, :m].astype(jnp.float32)
        return jnp.linalg.norm(ym - xm) / jnp.linalg.norm(ym)

    def check(x, y, **kw):
        out = jax.block_until_ready(spectral_convergence_loss(x, y, **kw))
        ref = ref_loss(x, y)
        assert jnp.allclose(out, ref, rtol=1e-5, atol=1e-6), (out, ref)

    # 1) structured path (F=80, per-plane reshape not possible), Lx != Ly,
    #    masked partial last tile, B=2 "parallel" batches.
    x = jnp.abs(jax.random.normal(ks[0], (2, 28, 80), dtype=jnp.float32))
    y = jnp.abs(jax.random.normal(ks[1], (2, 20, 80), dtype=jnp.float32))
    check(x, y)

    # 2) lane-dense flat path (L*F % 128 == 0) with B == 1 split into two
    #    "parallel" chunks (keeps the second v7x TensorCore busy).
    x = jnp.abs(jax.random.normal(ks[2], (1, 48, 80), dtype=jnp.float32))
    y = jnp.abs(jax.random.normal(ks[3], (1, 40, 80), dtype=jnp.float32))
    check(x, y)

    # 3) odd tile count with B == 1: exercises the clamped overrun tile of the
    #    two-chunk split (tiny VMEM budget only to force several tiles).
    x = jnp.abs(jax.random.normal(ks[4], (1, 22, 80), dtype=jnp.float32))
    y = jnp.abs(jax.random.normal(ks[5], (1, 26, 80), dtype=jnp.float32))
    check(x, y, input_vmem_budget=16 * 1024)

    # 4) tiny frame axis -> single full-extent tile fallback.
    x = jnp.abs(jax.random.normal(ks[6], (2, 9, 80), dtype=jnp.float32))
    y = jnp.abs(jax.random.normal(ks[7], (2, 5, 80), dtype=jnp.float32))
    check(x, y)

    print("KERNEL_OK")
</pallas_src>

<mosaic_0001>
module attributes {stable_mosaic.version = 11 : i64} {
  func.func @_sc_kernel(%arg0: i32, %arg1: i32, %arg2: i32, %arg3: memref<1x16x80xf32, #tpu.memory_space<vmem>>, %arg4: memref<1x16x80xf32, #tpu.memory_space<vmem>>, %arg5: memref<1x1x1x80xf32, #tpu.memory_space<vmem>>, %arg6: memref<1x1x1x80xf32, #tpu.memory_space<vmem>>) attributes {dimension_semantics = [#tpu.dimension_semantics<parallel>, #tpu.dimension_semantics<parallel>, #tpu.dimension_semantics<arbitrary>], iteration_bounds = array<i64: 2, 1, 2>, scalar_prefetch = 0 : i64, scratch_operands = 0 : i64, tpu.core_type = #tpu.core_type<tc>, window_params = [{transform_indices = @transform_0, window_bounds = array<i64: 1, 16, 80>}, {transform_indices = @transform_1, window_bounds = array<i64: 1, 16, 80>}, {transform_indices = @transform_2, window_bounds = array<i64: 1, 1, 1, 80>}, {transform_indices = @transform_3, window_bounds = array<i64: 1, 1, 1, 80>}]} {
    %c2_i32 = arith.constant 2 : i32
    %0 = arith.muli %arg1, %c2_i32 : i32
    %1 = arith.addi %0, %arg2 : i32
    %c0_i32 = arith.constant 0 : i32
    %2 = arith.cmpi eq, %arg2, %c0_i32 : i32
    %3 = arith.extui %2 : i1 to i32
    %c0_i32_0 = arith.constant 0 : i32
    %4 = arith.cmpi ne, %3, %c0_i32_0 : i32
    scf.if %4 {
      %cst = arith.constant 0.000000e+00 : f32
      %18 = vector.broadcast %cst : f32 to vector<1x80xf32>
      %c0_8 = arith.constant 0 : index
      %c0_9 = arith.constant 0 : index
      %c0_10 = arith.constant 0 : index
      %c0_11 = arith.constant 0 : index
      %19 = vector.load %arg5[%c0_8, %c0_9, %c0_10, %c0_11] : memref<1x1x1x80xf32, #tpu.memory_space<vmem>>, vector<1x1x1x80xf32>
      %20 = vector.shape_cast %19 : vector<1x1x1x80xf32> to vector<1x80xf32>
      %21 = vector.shape_cast %18 : vector<1x80xf32> to vector<1x1x1x80xf32>
      tpu.vector_store %arg5[%c0_8, %c0_9, %c0_10, %c0_11], %21 {strides = array<i32>} : memref<1x1x1x80xf32, #tpu.memory_space<vmem>>, vector<1x1x1x80xf32>,
      %cst_12 = arith.constant 0.000000e+00 : f32
      %22 = vector.broadcast %cst_12 : f32 to vector<1x80xf32>
      %c0_13 = arith.constant 0 : index
      %c0_14 = arith.constant 0 : index
      %c0_15 = arith.constant 0 : index
      %c0_16 = arith.constant 0 : index
      %23 = vector.load %arg6[%c0_13, %c0_14, %c0_15, %c0_16] : memref<1x1x1x80xf32, #tpu.memory_space<vmem>>, vector<1x1x1x80xf32>
      %24 = vector.shape_cast %23 : vector<1x1x1x80xf32> to vector<1x80xf32>
      %25 = vector.shape_cast %22 : vector<1x80xf32> to vector<1x1x1x80xf32>
      tpu.vector_store %arg6[%c0_13, %c0_14, %c0_15, %c0_16], %25 {strides = array<i32>} : memref<1x1x1x80xf32, #tpu.memory_space<vmem>>, vector<1x1x1x80xf32>,
    } else {
    }
    %c0 = arith.constant 0 : index
    %c0_1 = arith.constant 0 : index
    %c0_2 = arith.constant 0 : index
    %5 = vector.load %arg3[%c0, %c0_1, %c0_2] : memref<1x16x80xf32, #tpu.memory_space<vmem>>, vector<1x16x80xf32>
    %6 = vector.shape_cast %5 : vector<1x16x80xf32> to vector<16x80xf32>
    %c0_3 = arith.constant 0 : index
    %c0_4 = arith.constant 0 : index
    %c0_5 = arith.constant 0 : index
    %7 = vector.load %arg4[%c0_3, %c0_4, %c0_5] : memref<1x16x80xf32, #tpu.memory_space<vmem>>, vector<1x16x80xf32>
    %8 = vector.shape_cast %7 : vector<1x16x80xf32> to vector<16x80xf32>
    %9 = arith.subf %8, %6 : vector<16x80xf32>
    %10 = arith.mulf %9, %9 : vector<16x80xf32>
    %11 = arith.mulf %8, %8 : vector<16x80xf32>
    %c1_i32 = arith.constant 1 : i32
    %12 = arith.cmpi eq, %1, %c1_i32 : i32
    %true = arith.constant true
    %13 = arith.xori %12, %true : i1
    %14 = arith.extui %13 : i1 to i32
    %c0_i32_6 = arith.constant 0 : i32
    %15 = arith.cmpi ne, %14, %c0_i32_6 : i32
    scf.if %15 {
      %c0_8 = arith.constant 0 : index
      %c0_9 = arith.constant 0 : index
      %c0_10 = arith.constant 0 : index
      %c0_11 = arith.constant 0 : index
      %18 = vector.load %arg5[%c0_8, %c0_9, %c0_10, %c0_11] : memref<1x1x1x80xf32, #tpu.memory_space<vmem>>, vector<1x1x1x80xf32>
      %19 = vector.shape_cast %18 : vector<1x1x1x80xf32> to vector<1x80xf32>
      %cst = arith.constant dense<0.000000e+00> : vector<80xf32>
      %20 = vector.multi_reduction <add>, %10, %cst [0] : vector<16x80xf32> to vector<80xf32>
      %21 = vector.shape_cast %20 : vector<80xf32> to vector<1x80xf32>
      %22 = arith.addf %19, %21 : vector<1x80xf32>
      %c0_12 = arith.constant 0 : index
      %c0_13 = arith.constant 0 : index
      %c0_14 = arith.constant 0 : index
      %c0_15 = arith.constant 0 : index
      %23 = vector.load %arg5[%c0_12, %c0_13, %c0_14, %c0_15] : memref<1x1x1x80xf32, #tpu.memory_space<vmem>>, vector<1x1x1x80xf32>
      %24 = vector.shape_cast %23 : vector<1x1x1x80xf32> to vector<1x80xf32>
      %25 = vector.shape_cast %22 : vector<1x80xf32> to vector<1x1x1x80xf32>
      tpu.vector_store %arg5[%c0_12, %c0_13, %c0_14, %c0_15], %25 {strides = array<i32>} : memref<1x1x1x80xf32, #tpu.memory_space<vmem>>, vector<1x1x1x80xf32>,
      %c0_16 = arith.constant 0 : index
      %c0_17 = arith.constant 0 : index
      %c0_18 = arith.constant 0 : index
      %c0_19 = arith.constant 0 : index
      %26 = vector.load %arg6[%c0_16, %c0_17, %c0_18, %c0_19] : memref<1x1x1x80xf32, #tpu.memory_space<vmem>>, vector<1x1x1x80xf32>
      %27 = vector.shape_cast %26 : vector<1x1x1x80xf32> to vector<1x80xf32>
      %cst_20 = arith.constant dense<0.000000e+00> : vector<80xf32>
      %28 = vector.multi_reduction <add>, %11, %cst_20 [0] : vector<16x80xf32> to vector<80xf32>
      %29 = vector.shape_cast %28 : vector<80xf32> to vector<1x80xf32>
      %30 = arith.addf %27, %29 : vector<1x80xf32>
      %c0_21 = arith.constant 0 : index
      %c0_22 = arith.constant 0 : index
      %c0_23 = arith.constant 0 : index
      %c0_24 = arith.constant 0 : index
      %31 = vector.load %arg6[%c0_21, %c0_22, %c0_23, %c0_24] : memref<1x1x1x80xf32, #tpu.memory_space<vmem>>, vector<1x1x1x80xf32>
      %32 = vector.shape_cast %31 : vector<1x1x1x80xf32> to vector<1x80xf32>
      %33 = vector.shape_cast %30 : vector<1x80xf32> to vector<1x1x1x80xf32>
      tpu.vector_store %arg6[%c0_21, %c0_22, %c0_23, %c0_24], %33 {strides = array<i32>} : memref<1x1x1x80xf32, #tpu.memory_space<vmem>>, vector<1x1x1x80xf32>,
    } else {
    }
    %16 = arith.extui %12 : i1 to i32
    %c0_i32_7 = arith.constant 0 : i32
    %17 = arith.cmpi ne, %16, %c0_i32_7 : i32
    scf.if %17 {
      %18 = tpu.iota {dimensions = array<i32: 0>} : vector<16x80xi32>
      %19 = tpu.iota {dimensions = array<i32: 1>} : vector<16x80xi32>
      %c16_i32 = arith.constant 16 : i32
      %20 = arith.muli %1, %c16_i32 : i32
      %21 = vector.broadcast %20 : i32 to vector<16x80xi32>
      %22 = arith.addi %21, %18 : vector<16x80xi32>
      %c80_i32 = arith.constant 80 : i32
      %23 = vector.broadcast %c80_i32 : i32 to vector<16x80xi32>
      %24 = arith.muli %22, %23 : vector<16x80xi32>
      %25 = arith.addi %24, %19 : vector<16x80xi32>
      %c1600_i32 = arith.constant 1600 : i32
      %26 = vector.broadcast %c1600_i32 : i32 to vector<16x80xi32>
      %27 = arith.cmpi slt, %25, %26 : vector<16x80xi32>
      %cst = arith.constant 0.000000e+00 : f32
      %28 = vector.broadcast %cst : f32 to vector<16x80xf32>
      %29 = arith.select %27, %10, %28 : vector<16x80xi1>, vector<16x80xf32>
      %cst_8 = arith.constant 0.000000e+00 : f32
      %30 = vector.broadcast %cst_8 : f32 to vector<16x80xf32>
      %31 = arith.select %27, %11, %30 : vector<16x80xi1>, vector<16x80xf32>
      %c0_9 = arith.constant 0 : index
      %c0_10 = arith.constant 0 : index
      %c0_11 = arith.constant 0 : index
      %c0_12 = arith.constant 0 : index
      %32 = vector.load %arg5[%c0_9, %c0_10, %c0_11, %c0_12] : memref<1x1x1x80xf32, #tpu.memory_space<vmem>>, vector<1x1x1x80xf32>
      %33 = vector.shape_cast %32 : vector<1x1x1x80xf32> to vector<1x80xf32>
      %cst_13 = arith.constant dense<0.000000e+00> : vector<80xf32>
      %34 = vector.multi_reduction <add>, %29, %cst_13 [0] : vector<16x80xf32> to vector<80xf32>
      %35 = vector.shape_cast %34 : vector<80xf32> to vector<1x80xf32>
      %36 = arith.addf %33, %35 : vector<1x80xf32>
      %c0_14 = arith.constant 0 : index
      %c0_15 = arith.constant 0 : index
      %c0_16 = arith.constant 0 : index
      %c0_17 = arith.constant 0 : index
      %37 = vector.load %arg5[%c0_14, %c0_15, %c0_16, %c0_17] : memref<1x1x1x80xf32, #tpu.memory_space<vmem>>, vector<1x1x1x80xf32>
      %38 = vector.shape_cast %37 : vector<1x1x1x80xf32> to vector<1x80xf32>
      %39 = vector.shape_cast %36 : vector<1x80xf32> to vector<1x1x1x80xf32>
      tpu.vector_store %arg5[%c0_14, %c0_15, %c0_16, %c0_17], %39 {strides = array<i32>} : memref<1x1x1x80xf32, #tpu.memory_space<vmem>>, vector<1x1x1x80xf32>,
      %c0_18 = arith.constant 0 : index
      %c0_19 = arith.constant 0 : index
      %c0_20 = arith.constant 0 : index
      %c0_21 = arith.constant 0 : index
      %40 = vector.load %arg6[%c0_18, %c0_19, %c0_20, %c0_21] : memref<1x1x1x80xf32, #tpu.memory_space<vmem>>, vector<1x1x1x80xf32>
      %41 = vector.shape_cast %40 : vector<1x1x1x80xf32> to vector<1x80xf32>
      %cst_22 = arith.constant dense<0.000000e+00> : vector<80xf32>
      %42 = vector.multi_reduction <add>, %31, %cst_22 [0] : vector<16x80xf32> to vector<80xf32>
      %43 = vector.shape_cast %42 : vector<80xf32> to vector<1x80xf32>
      %44 = arith.addf %41, %43 : vector<1x80xf32>
      %c0_23 = arith.constant 0 : index
      %c0_24 = arith.constant 0 : index
      %c0_25 = arith.constant 0 : index
      %c0_26 = arith.constant 0 : index
      %45 = vector.load %arg6[%c0_23, %c0_24, %c0_25, %c0_26] : memref<1x1x1x80xf32, #tpu.memory_space<vmem>>, vector<1x1x1x80xf32>
      %46 = vector.shape_cast %45 : vector<1x1x1x80xf32> to vector<1x80xf32>
      %47 = vector.shape_cast %44 : vector<1x80xf32> to vector<1x1x1x80xf32>
      tpu.vector_store %arg6[%c0_23, %c0_24, %c0_25, %c0_26], %47 {strides = array<i32>} : memref<1x1x1x80xf32, #tpu.memory_space<vmem>>, vector<1x1x1x80xf32>,
    } else {
    }
    return
  }
  func.func @transform_0(%arg0: i32, %arg1: i32, %arg2: i32) -> (i32, i32, i32) {
    %c2_i32 = arith.constant 2 : i32
    %0 = arith.muli %arg1, %c2_i32 : i32
    %1 = arith.addi %0, %arg2 : i32
    %c0_i32 = arith.constant 0 : i32
    %c0_i32_0 = arith.constant 0 : i32
    return %arg0, %1, %c0_i32 : i32, i32, i32
  }
  func.func @transform_1(%arg0: i32, %arg1: i32, %arg2: i32) -> (i32, i32, i32) {
    %c2_i32 = arith.constant 2 : i32
    %0 = arith.muli %arg1, %c2_i32 : i32
    %1 = arith.addi %0, %arg2 : i32
    %c0_i32 = arith.constant 0 : i32
    %c0_i32_0 = arith.constant 0 : i32
    return %arg0, %1, %c0_i32 : i32, i32, i32
  }
  func.func @transform_2(%arg0: i32, %arg1: i32, %arg2: i32) -> (i32, i32, i32, i32) {
    %c0_i32 = arith.constant 0 : i32
    %c0_i32_0 = arith.constant 0 : i32
    %c0_i32_1 = arith.constant 0 : i32
    return %arg0, %arg1, %c0_i32, %c0_i32_0 : i32, i32, i32, i32
  }
  func.func @transform_3(%arg0: i32, %arg1: i32, %arg2: i32) -> (i32, i32, i32, i32) {
    %c0_i32 = arith.constant 0 : i32
    %c0_i32_0 = arith.constant 0 : i32
    %c0_i32_1 = arith.constant 0 : i32
    return %arg0, %arg1, %c0_i32, %c0_i32_0 : i32, i32, i32, i32
  }
}

</mosaic_0001>

<llo_original>
// kernel: tpu_custom_call.1
$region0: #{tpu_custom_call.1}
  #allocation0 [shape = 'u32[]', space=smem, size = 0x4, offset = 0x4, fixed_abs, tag = 'smem constant byte address 0x4 - core index']
  #allocation1 [shape = 'u32[144,128]{1,0:T(1,128)}', space=vmem, size = 0x12000, scoped, tag = 'internal scratch']
  %s0 = inlined_call_operand.vmem [shape: f32[2,28,80], index: 0, kind: input, shape index: {}]
  %s1 = inlined_call_operand.vmem [shape: f32[2,20,80], index: 1, kind: input, shape index: {}]
  %s2 = inlined_call_operand.hbm [shape: f32[2,1,1,80], index: 2, kind: output, shape index: {0}]
  %s3 = inlined_call_operand.hbm [shape: f32[2,1,1,80], index: 3, kind: output, shape index: {1}]
  %4 = xla_tuple %s2, %s3
  %s5 = sld [smem:[#allocation0]]
  $region61: #{tpu_custom_call.1} parent=0
    _
  %s7 = ssub.s32 1, %s5
  %s8 = scalar_select 0, %s7, %s5
  $region1: #{tpu_custom_call.1} parent=0
    #allocation2 [shape = 'u8[1024]{0}', space=vmem, size = 0x400, scoped, tag = 'output window, operand 0']
    #allocation3 [shape = 's32[2]{0}', space=sflag, size = 0x8, scoped, tag = 'scoped memory for tpu_custom_call.1']
    #allocation4 [shape = 'u8[1024]{0}', space=vmem, size = 0x400, scoped, tag = 'output window, operand 1']
    #allocation5 [shape = 's32[2]{0}', space=sflag, size = 0x8, scoped, tag = 'scoped memory for tpu_custom_call.1']
    %9 = vsyncpa [#allocation3], 0
    %s10 = scalar_lea.sflag [#allocation3], 1
    %11 = vsyncpa %s10, 0
    %12 = vsyncpa [#allocation5], 0
    %s13 = scalar_lea.sflag [#allocation5], 1
    %14 = vsyncpa %s13, 0
    loop: start=0, step=1, limit=6
    $region2: #{tpu_custom_call.1} parent=1 // loop_pre_header
      _
    $region3: #{tpu_custom_call.1} parent=1 // loop_header
      %s16 = sphi 0, %s20
      %p17 = scmp.ge.s32.totalorder %s16, 6
      %s23 = sphi 0, %s42
      %s24 = sphi 0, %s38
      %s25 = sphi 0, %s34
      %s26 = sphi 0, %s23
      %s27 = sphi 0, %s24
      %s28 = sphi 0, %s25
      %s29 = sphi 0, %s26
      %s30 = sphi 0, %s27
      %s31 = sphi 0, %s28
      %s51 = sphi 0, %s53
      %s54 = sphi 0, %s51
      %s55 = sphi 0, %s54
      %s71 = sphi 0, %s55
      %s83 = sphi 0, %s85
      %s86 = sphi 0, %s83
      %s87 = sphi 0, %s86
      %s103 = sphi 0, %s87
      %s111 = sphi 0, %s113
      %s114 = sphi 0, %s111
      %s115 = sphi 0, %s114
      %s131 = sphi 0, %s115
      %s139 = sphi 0, %s141
      %s142 = sphi 0, %s139
      %s143 = sphi 0, %s142
      %s159 = sphi 0, %s143
    $region4: #{tpu_custom_call.1} parent=1 // loop_header_branch
      %19 = sbr.rel (%p17) target = $region8
    $region5: #{tpu_custom_call.1} parent=1 // loop_body
      %s21 = ssub.s32 %s16, 1
      %s22 = ssub.s32 %s16, 2
      %s32 = sadd.s32 1, %s25
      %p33 = scmp.ge.s32.totalorder %s32, 2
      %s34 = scalar_select %p33, 0, %s32
      %s35 = sadd.s32 1, %s24
      %s36 = scalar_select %p33, %s35, %s24
      %p37 = scmp.ge.s32.totalorder %s36, 1
      %s38 = scalar_select %p37, 0, %s36
      %s39 = sadd.s32 1, %s23
      %s40 = scalar_select %p37, %s39, %s23
      %p41 = scmp.ge.s32.totalorder %s40, 2
      %s42 = scalar_select %p41, 0, %s40
      %s43 = smul.u32 %s24, 2
      %s44 = sadd.s32 %s43, %s25
      %s45 = smul.u32 %s38, 2
      %s46 = sadd.s32 %s45, %s34
      %s47 = ssub.s32 %s23, %s42
      %s48 = ssub.s32 %s44, %s46
      %s49 = sor.u32 %s47, %s48
      %p50 = scmp.eq.s32.totalorder %s49, 0
      %s52 = sadd.s32 %s51, 1
      %s53 = scalar_select %p50, %s51, %s52
      %p56 = pneg %p50
      %p57 = scmp.eq.s32.totalorder %s16, 3
      %p58 = por %p56, %p57
      %p59 = scmp.ne.s32.totalorder %s51, %s54
      %p60 = scmp.eq.s32.totalorder %s16, 0
      %p61 = por %p59, %p60
      %p62 = scmp.ne.s32.totalorder %s51, %s54
      %p63 = scmp.eq.s32.totalorder %s21, 3
      %p64 = por %p62, %p63
      %p65 = scmp.ne.s32.totalorder %s54, %s55
      %p66 = scmp.eq.s32.totalorder %s21, 0
      %p67 = por %p65, %p66
      %p68 = scmp.ne.s32.totalorder %s54, %s55
      %p69 = scmp.eq.s32.totalorder %s22, 3
      %p70 = por %p68, %p69
      %p72 = scmp.ne.s32.totalorder %s55, %s71
      %p73 = scmp.eq.s32.totalorder %s22, 0
      %p74 = por %p72, %p73
      %s75 = smul.u32 %s24, 2
      %s76 = sadd.s32 %s75, %s25
      %s77 = smul.u32 %s38, 2
      %s78 = sadd.s32 %s77, %s34
      %s79 = ssub.s32 %s23, %s42
      %s80 = ssub.s32 %s76, %s78
      %s81 = sor.u32 %s79, %s80
      %p82 = scmp.eq.s32.totalorder %s81, 0
      %s84 = sadd.s32 %s83, 1
      %s85 = scalar_select %p82, %s83, %s84
      %p88 = pneg %p82
      %p89 = scmp.eq.s32.totalorder %s16, 3
      %p90 = por %p88, %p89
      %p91 = scmp.ne.s32.totalorder %s83, %s86
      %p92 = scmp.eq.s32.totalorder %s16, 0
      %p93 = por %p91, %p92
      %p94 = scmp.ne.s32.totalorder %s83, %s86
      %p95 = scmp.eq.s32.totalorder %s21, 3
      %p96 = por %p94, %p95
      %p97 = scmp.ne.s32.totalorder %s86, %s87
      %p98 = scmp.eq.s32.totalorder %s21, 0
      %p99 = por %p97, %p98
      %p100 = scmp.ne.s32.totalorder %s86, %s87
      %p101 = scmp.eq.s32.totalorder %s22, 3
      %p102 = por %p100, %p101
      %p104 = scmp.ne.s32.totalorder %s87, %s103
      %p105 = scmp.eq.s32.totalorder %s22, 0
      %p106 = por %p104, %p105
      %s107 = ssub.s32 %s23, %s42
      %s108 = ssub.s32 %s24, %s38
      %s109 = sor.u32 %s107, %s108
      %p110 = scmp.eq.s32.totalorder %s109, 0
      %s112 = sadd.s32 %s111, 1
      %s113 = scalar_select %p110, %s111, %s112
      %p116 = pneg %p110
      %p117 = scmp.eq.s32.totalorder %s16, 3
      %p118 = por %p116, %p117
      %p119 = scmp.ne.s32.totalorder %s111, %s114
      %p120 = scmp.eq.s32.totalorder %s16, 0
      %p121 = por %p119, %p120
      %p122 = scmp.ne.s32.totalorder %s111, %s114
      %p123 = scmp.eq.s32.totalorder %s21, 3
      %p124 = por %p122, %p123
      %p125 = scmp.ne.s32.totalorder %s114, %s115
      %p126 = scmp.eq.s32.totalorder %s21, 0
      %p127 = por %p125, %p126
      %p128 = scmp.ne.s32.totalorder %s114, %s115
      %p129 = scmp.eq.s32.totalorder %s22, 3
      %p130 = por %p128, %p129
      %p132 = scmp.ne.s32.totalorder %s115, %s131
      %p133 = scmp.eq.s32.totalorder %s22, 0
      %p134 = por %p132, %p133
      %s135 = ssub.s32 %s23, %s42
      %s136 = ssub.s32 %s24, %s38
      %s137 = sor.u32 %s135, %s136
      %p138 = scmp.eq.s32.totalorder %s137, 0
      %s140 = sadd.s32 %s139, 1
      %s141 = scalar_select %p138, %s139, %s140
      %p144 = pneg %p138
      %p145 = scmp.eq.s32.totalorder %s16, 3
      %p146 = por %p144, %p145
      %p147 = scmp.ne.s32.totalorder %s139, %s142
      %p148 = scmp.eq.s32.totalorder %s16, 0
      %p149 = por %p147, %p148
      %p150 = scmp.ne.s32.totalorder %s139, %s142
      %p151 = scmp.eq.s32.totalorder %s21, 3
      %p152 = por %p150, %p151
      %p153 = scmp.ne.s32.totalorder %s142, %s143
      %p154 = scmp.eq.s32.totalorder %s21, 0
      %p155 = por %p153, %p154
      %p156 = scmp.ne.s32.totalorder %s142, %s143
      %p157 = scmp.eq.s32.totalorder %s22, 3
      %p158 = por %p156, %p157
      %p160 = scmp.ne.s32.totalorder %s143, %s159
      %p161 = scmp.eq.s32.totalorder %s22, 0
      %p162 = por %p160, %p161
      %p163 = scmp.le.s32.totalorder 1, %s16
      %p164 = scmp.lt.s32.totalorder %s16, 5
      %p165 = pnand %p163, %p164
      %p166 = pneg %p165
      // Predicated region
      $region9: #{tpu_custom_call.1} parent=5 // pred_check
        _
      $region10: #{tpu_custom_call.1} parent=5 // pred_check_branch
        %168 = sbr.rel (%p165) target = $region12
      $region11: #{tpu_custom_call.1} parent=5 // pred_region
        %s169 = ssub.s32 %s16, 1
      $region12: #{tpu_custom_call.1} parent=5 // pred_fallthru
        _
      %p170 = scmp.lt.s32.totalorder %s16, 4
      // Predicated region
      $region13: #{tpu_custom_call.1} parent=5 // pred_check
        %p171 = pneg %p170
      $region14: #{tpu_custom_call.1} parent=5 // pred_check_branch
        %173 = sbr.rel (%p171) target = $region16
      $region15: #{tpu_custom_call.1} parent=5 // pred_region
        // Predicated region
        $region17: #{tpu_custom_call.1} parent=15 // pred_check
          %p174 = pneg %p61
        $region18: #{tpu_custom_call.1} parent=15 // pred_check_branch
          %176 = sbr.rel (%p174) target = $region20
        $region19: #{tpu_custom_call.1} parent=15 // pred_region
          %s177 = smul.u32 %s24, 2
          %s178 = sadd.s32 %s177, %s25
          %s179 = smul.u32 2, %s178
          %p180 = scmp.lt.s32.totalorder %s23, 1
          %s181 = scalar_select %p180, %s23, 1
          %p182 = scmp.lt.s32.totalorder %s179, 3
          %s183 = scalar_select %p182, %s179, 3
          %s184 = smul.addr %s181, 4
          %s185 = sadd.s32 %s183, %s184
          %s186 = smul.addr %s185, 8
          %s187 = scalar_lea.vmem %s0, %s186
          %s188 = smul.u32 %s24, 2
          %s189 = sadd.s32 %s188, %s25
          %s190 = smul.u32 2, %s189
        $region20: #{tpu_custom_call.1} parent=15 // pred_fallthru
          _
        // Predicated region
        $region21: #{tpu_custom_call.1} parent=15 // pred_check
          %p191 = pneg %p93
        $region22: #{tpu_custom_call.1} parent=15 // pred_check_branch
          %193 = sbr.rel (%p191) target = $region24
        $region23: #{tpu_custom_call.1} parent=15 // pred_region
          %s194 = smul.u32 %s24, 2
          %s195 = sadd.s32 %s194, %s25
          %s196 = smul.u32 2, %s195
          %s197 = ssub.s32 3, %s196
          %p198 = scmp.lt.s32.totalorder %s197, 2
          %s199 = scalar_select %p198, %s197, 2
          %s200 = smul.u32 128, %s199
          %p201 = scmp.lt.s32.totalorder %s23, 1
          %s202 = scalar_select %p201, %s23, 1
          %p203 = scmp.lt.s32.totalorder %s196, 2
          %s204 = scalar_select %p203, %s196, 2
          %s205 = smul.addr %s202, 3
          %s206 = sadd.s32 %s204, %s205
          %s207 = smul.addr %s206, 8
          %s208 = scalar_lea.vmem %s1, %s207
          %s209 = smul.u32 %s24, 2
          %s210 = sadd.s32 %s209, %s25
          %s211 = smul.u32 2, %s210
          %s212 = ssub.s32 3, %s211
          %p213 = scmp.lt.s32.totalorder %s212, 2
          %s214 = scalar_select %p213, %s212, 2
          %s215 = smul.u32 128, %s214
        $region24: #{tpu_custom_call.1} parent=15 // pred_fallthru
          _
      $region16: #{tpu_custom_call.1} parent=5 // pred_fallthru
        _
      %p216 = scmp.le.s32.totalorder 1, %s16
      %p217 = scmp.lt.s32.totalorder %s16, 5
      %p218 = pnand %p216, %p217
      %p219 = pneg %p218
      // Predicated region
      $region25: #{tpu_custom_call.1} parent=5 // pred_check
        _
      $region26: #{tpu_custom_call.1} parent=5 // pred_check_branch
        %221 = sbr.rel (%p218) target = $region28
      $region27: #{tpu_custom_call.1} parent=5 // pred_region
        %s222 = ssub.s32 %s16, 1
        %s223 = smul.u32 %s27, 2
        %s224 = sadd.s32 %s223, %s28
        %s225 = smul.u32 2, %s224
        %p226 = scmp.lt.s32.totalorder %s26, 1
        %s227 = scalar_select %p226, %s26, 1
        %p228 = scmp.lt.s32.totalorder %s225, 3
        %s229 = scalar_select %p228, %s225, 3
        %s230 = smul.addr %s227, 4
        %s231 = sadd.s32 %s229, %s230
        %s232 = smul.addr %s231, 8
        %s233 = scalar_lea.vmem %s0, %s232
        %p234 = pneg %p67
        %p235 = pneg %p64
        %s236 = smul.u32 %s27, 2
        %s237 = sadd.s32 %s236, %s28
        %s238 = smul.u32 2, %s237
        %s239 = ssub.s32 3, %s238
        %p240 = scmp.lt.s32.totalorder %s239, 2
        %s241 = scalar_select %p240, %s239, 2
        %s242 = smul.u32 128, %s241
        %p243 = scmp.lt.s32.totalorder %s26, 1
        %s244 = scalar_select %p243, %s26, 1
        %p245 = scmp.lt.s32.totalorder %s238, 2
        %s246 = scalar_select %p245, %s238, 2
        %s247 = smul.addr %s244, 3
        %s248 = sadd.s32 %s246, %s247
        %s249 = smul.addr %s248, 8
        %s250 = scalar_lea.vmem %s1, %s249
        %p251 = pneg %p99
        %p252 = pneg %p96
        %p253 = pneg %p127
        %p254 = pneg %p124
        %s255 = sand.u32 %s114, 1
        %s256 = scalar_lea.sflag [#allocation3], %s255
        %s257 = sand.u32 %s114, 1
        %s258 = scalar_lea.vmem [#allocation2], %s257
        %p259 = pneg %p155
        %p260 = pneg %p152
        %s261 = sand.u32 %s142, 1
        %s262 = scalar_lea.sflag [#allocation5], %s261
        %s263 = sand.u32 %s142, 1
        %s264 = scalar_lea.vmem [#allocation4], %s263
        %s265 = smul.u32 %s27, 2
        %s266 = sadd.s32 %s265, %s28
        %s267 = smul.u32 2, %s266
        %p268 = scmp.lt.s32.totalorder %s26, 1
        %s269 = scalar_select %p268, %s26, 1
        %p270 = scmp.lt.s32.totalorder %s267, 3
        %s271 = scalar_select %p270, %s267, 3
        %s272 = smul.addr %s269, 4
        %s273 = sadd.s32 %s271, %s272
        %s274 = smul.addr %s273, 8
        %s275 = scalar_lea.vmem %s0, %s274
        %s276 = smul.u32 %s27, 2
        %s277 = sadd.s32 %s276, %s28
        %s278 = smul.u32 2, %s277
        %s279 = smul.u32 %s27, 2
        %s280 = sadd.s32 %s279, %s28
        %s281 = smul.u32 2, %s280
        %s282 = ssub.s32 3, %s281
        %p283 = scmp.lt.s32.totalorder %s282, 2
        %s284 = scalar_select %p283, %s282, 2
        %s285 = smul.u32 128, %s284
        %p286 = scmp.lt.s32.totalorder %s26, 1
        %s287 = scalar_select %p286, %s26, 1
        %p288 = scmp.lt.s32.totalorder %s281, 2
        %s289 = scalar_select %p288, %s281, 2
        %s290 = smul.addr %s287, 3
        %s291 = sadd.s32 %s289, %s290
        %s292 = smul.addr %s291, 8
        %s293 = scalar_lea.vmem %s1, %s292
        %s294 = smul.u32 %s27, 2
        %s295 = sadd.s32 %s294, %s28
        %s296 = smul.u32 2, %s295
        %s297 = ssub.s32 3, %s296
        %p298 = scmp.lt.s32.totalorder %s297, 2
        %s299 = scalar_select %p298, %s297, 2
        %s300 = smul.u32 128, %s299
        %s301 = smul.u32 %s27, 2
        %s302 = sadd.s32 %s301, %s28
        %p303 = scmp.eq.s32.totalorder %s28, 0
        // Predicated region
        $region29: #{tpu_custom_call.1} parent=27 // pred_check
          %p304 = pneg %p303
        $region30: #{tpu_custom_call.1} parent=27 // pred_check_branch
          %306 = sbr.rel (%p304) target = $region32
        $region31: #{tpu_custom_call.1} parent=27 // pred_region
          %vm307 = vcmask 647168
          %308 = vst.msk [vmem:[%s258] sm:$0x1] %vm307, 0.0
          %309 = vst.msk [vmem:[%s264] sm:$0x1] %vm307, 0.0
        $region32: #{tpu_custom_call.1} parent=27 // pred_fallthru
          _
        %v310 = vld [vmem:[%s275] sm:$0xff]
        %v311 = vld [vmem:[%s275 + $0x8] sm:$0xff]
        %v312 = vld [vmem:[%s293] sm:$0xff]
        %v313 = vld [vmem:[%s293 + $0x8] sm:$0xff]
        %v314 = vsub.f32 %v312, %v310
        %v315 = vsub.f32 %v313, %v311
        %v316 = vmul.f32 %v314, %v314
        %v317 = vmul.f32 %v315, %v315
        %v318 = vmul.f32 %v312, %v312
        %v319 = vmul.f32 %v313, %v313
        %p320 = scmp.eq.s32.totalorder %s302, 1
        %p321 = scmp.ne.s32.totalorder %s302, 1
        // Predicated region
        $region33: #{tpu_custom_call.1} parent=27 // pred_check
          %p322 = pneg %p321
        $region34: #{tpu_custom_call.1} parent=27 // pred_check_branch
          %324 = sbr.rel (%p322) target = $region36
        $region35: #{tpu_custom_call.1} parent=27 // pred_region
          %v325 = vld [vmem:[%s258] sm:$0x1]
          %vm326 = vcmask 654336
          %v327 = vsel %vm326, %v316, 0.0
          %v328 = vsel %vm326, %v317, 0.0
          %v329 = vadd.f32 %v327, %v328
          %v330 = vrot.slane %v329, 4
          %v331 = vadd.f32 %v329, %v330
          %v332 = vrot.slane %v331, 2
          %v333 = vadd.f32 %v331, %v332
          %v334 = vrot.slane %v333, 1
          %v335 = vadd.f32 %v333, %v334
          %v336 = vadd.f32 %v325, %v335
          %vm337 = vcmask 647168
          %338 = vst.msk [vmem:[%s258] sm:$0x1] %vm337, %v336
          %v339 = vld [vmem:[%s264] sm:$0x1]
          %v340 = vsel %vm326, %v318, 0.0
          %v341 = vsel %vm326, %v319, 0.0
          %v342 = vadd.f32 %v340, %v341
          %v343 = vrot.slane %v342, 4
          %v344 = vadd.f32 %v342, %v343
          %v345 = vrot.slane %v344, 2
          %v346 = vadd.f32 %v344, %v345
          %v347 = vrot.slane %v346, 1
          %v348 = vadd.f32 %v346, %v347
          %v349 = vadd.f32 %v339, %v348
          %350 = vst.msk [vmem:[%s264] sm:$0x1] %vm337, %v349
        $region36: #{tpu_custom_call.1} parent=27 // pred_fallthru
          _
        // Predicated region
        $region37: #{tpu_custom_call.1} parent=27 // pred_check
          %p351 = pneg %p320
        $region38: #{tpu_custom_call.1} parent=27 // pred_check_branch
          %353 = sbr.rel (%p351) target = $region40
        $region39: #{tpu_custom_call.1} parent=27 // pred_region
          %v354 = vlaneseq
          %v355 = vshrl.u32 %v354, 7
          %v356 = vadd.s32 %v355, 8
          %v357 = vlaneseq
          %v358 = vand.u32 %v357, 127
          %s359 = smul.u32 %s302, 16
          %v360 = vstv %s359
          %v361 = vadd.s32 %v360, %v355
          %v362 = vadd.s32 %v360, %v356
          %v363 = vmul.u32 %v361, 80
          %v364 = vmul.u32 %v362, 80
          %v365 = vadd.s32 %v363, %v358
          %v366 = vadd.s32 %v364, %v358
          %vm367 = vcmp.lt.s32.totalorder %v365, 1600
          %vm368 = vcmp.lt.s32.totalorder %v366, 1600
          %v369 = vsel %vm367, %v316, 0.0
          %v370 = vsel %vm368, %v317, 0.0
          %v371 = vsel %vm367, %v318, 0.0
          %v372 = vsel %vm368, %v319, 0.0
          %v373 = vld [vmem:[%s258] sm:$0x1]
          %vm374 = vcmask 654336
          %v375 = vsel %vm374, %v369, 0.0
          %v376 = vsel %vm374, %v370, 0.0
          %v377 = vadd.f32 %v375, %v376
          %v378 = vrot.slane %v377, 4
          %v379 = vadd.f32 %v377, %v378
          %v380 = vrot.slane %v379, 2
          %v381 = vadd.f32 %v379, %v380
          %v382 = vrot.slane %v381, 1
          %v383 = vadd.f32 %v381, %v382
          %v384 = vadd.f32 %v373, %v383
          %vm385 = vcmask 647168
          %386 = vst.msk [vmem:[%s258] sm:$0x1] %vm385, %v384
          %v387 = vld [vmem:[%s264] sm:$0x1]
          %v388 = vsel %vm374, %v371, 0.0
          %v389 = vsel %vm374, %v372, 0.0
          %v390 = vadd.f32 %v388, %v389
          %v391 = vrot.slane %v390, 4
          %v392 = vadd.f32 %v390, %v391
          %v393 = vrot.slane %v392, 2
          %v394 = vadd.f32 %v392, %v393
          %v395 = vrot.slane %v394, 1
          %v396 = vadd.f32 %v394, %v395
          %v397 = vadd.f32 %v387, %v396
          %398 = vst.msk [vmem:[%s264] sm:$0x1] %vm385, %v397
        $region40: #{tpu_custom_call.1} parent=27 // pred_fallthru
          _
        %s399 = sand.u32 %s114, 1
        %s400 = scalar_lea.sflag [#allocation3], %s399
        %s401 = sand.u32 %s114, 1
        %s402 = scalar_lea.vmem [#allocation2], %s401
        %s403 = sand.u32 %s142, 1
        %s404 = scalar_lea.sflag [#allocation5], %s403
        %s405 = sand.u32 %s142, 1
        %s406 = scalar_lea.vmem [#allocation4], %s405
        // Predicated region
        $region41: #{tpu_custom_call.1} parent=27 // pred_check
          %p407 = pneg %p124
        $region42: #{tpu_custom_call.1} parent=27 // pred_check_branch
          %409 = sbr.rel (%p407) target = $region44
        $region43: #{tpu_custom_call.1} parent=27 // pred_region
          %s411 = ssub.s32 16, 16
          %412 = vsyncadd %s400, %s411
          %s413 = sadd.s32 %s27, %s26
          %s414 = smul.addr %s413, 16
          %s415 = scalar_lea.hbm %s2, %s414
          %s417 = sshll.u32 %s402, 4
          %s418 = int_to_ptr.vmem [resolvable:$true] %s417
          %420 = dma.vmem_to_hbm [thread:$0]  %s418, 16, %s415, %s400
        $region44: #{tpu_custom_call.1} parent=27 // pred_fallthru
          _
        // Predicated region
        $region45: #{tpu_custom_call.1} parent=27 // pred_check
          %p421 = pneg %p152
        $region46: #{tpu_custom_call.1} parent=27 // pred_check_branch
          %423 = sbr.rel (%p421) target = $region48
        $region47: #{tpu_custom_call.1} parent=27 // pred_region
          %s425 = ssub.s32 16, 16
          %426 = vsyncadd %s404, %s425
          %s427 = sadd.s32 %s27, %s26
          %s428 = smul.addr %s427, 16
          %s429 = scalar_lea.hbm %s3, %s428
          %s431 = sshll.u32 %s406, 4
          %s432 = int_to_ptr.vmem [resolvable:$true] %s431
          %434 = dma.vmem_to_hbm [thread:$0]  %s432, 16, %s429, %s404
        $region48: #{tpu_custom_call.1} parent=27 // pred_fallthru
          _
      $region28: #{tpu_custom_call.1} parent=5 // pred_fallthru
        _
      %p435 = scmp.le.s32.totalorder 2, %s16
      // Predicated region
      $region49: #{tpu_custom_call.1} parent=5 // pred_check
        %p436 = pneg %p435
      $region50: #{tpu_custom_call.1} parent=5 // pred_check_branch
        %438 = sbr.rel (%p436) target = $region52
      $region51: #{tpu_custom_call.1} parent=5 // pred_region
        %s439 = ssub.s32 %s16, 2
        // Predicated region
        $region53: #{tpu_custom_call.1} parent=51 // pred_check
          %p440 = pneg %p130
        $region54: #{tpu_custom_call.1} parent=51 // pred_check_branch
          %442 = sbr.rel (%p440) target = $region56
        $region55: #{tpu_custom_call.1} parent=51 // pred_region
          %s443 = sand.u32 %s115, 1
          %s444 = scalar_lea.sflag [#allocation3], %s443
          %s445 = sand.u32 %s115, 1
          %s446 = scalar_lea.vmem [#allocation2], %s445
          %447 = dma.done %s444, 16
        $region56: #{tpu_custom_call.1} parent=51 // pred_fallthru
          _
        // Predicated region
        $region57: #{tpu_custom_call.1} parent=51 // pred_check
          %p448 = pneg %p158
        $region58: #{tpu_custom_call.1} parent=51 // pred_check_branch
          %450 = sbr.rel (%p448) target = $region60
        $region59: #{tpu_custom_call.1} parent=51 // pred_region
          %s451 = sand.u32 %s143, 1
          %s452 = scalar_lea.sflag [#allocation5], %s451
          %s453 = sand.u32 %s143, 1
          %s454 = scalar_lea.vmem [#allocation4], %s453
          %455 = dma.done %s452, 16
        $region60: #{tpu_custom_call.1} parent=51 // pred_fallthru
          _
      $region52: #{tpu_custom_call.1} parent=5 // pred_fallthru
        _
    $region6: #{tpu_custom_call.1} parent=1 // loop_footer
      %s20 = sadd.s32 1, %s16
    $region7: #{tpu_custom_call.1} parent=1 // loop_footer_branch
      %15 = sbr.rel target = $region3
    $region8: #{tpu_custom_call.1} parent=1 // loop_exit
      _
    %456 = vsyncpa [#allocation3], 1
    %s457 = scalar_lea.sflag [#allocation3], 1
    %458 = vsyncpa %s457, 1
    %459 = vsyncpa [#allocation5], 1
    %s460 = scalar_lea.sflag [#allocation5], 1
    %461 = vsyncpa %s460, 1

</llo_original>
